<compile_context>
chip_gen: v5e
topology: v5e:2x2
jax: 0.10.0
libtpu: 0.0.40
codegen_flags: <defaults>
</compile_context>

<pallas_src>
import functools

import jax
import jax.numpy as jnp
from jax.experimental import pallas as pl
from jax.experimental.pallas import tpu as pltpu

# ----------------------- model hyper-parameters (small) -----------------------
IN_DIM = 8        # spider-patch node feature dim ('aggregated_feats')
READOUT_DIM = 16  # UniversalReadout output dim == mesh-graph node feature dim
HIDDEN_DIM = 32   # GraphConv hidden dim
OUT_FEATS = 8     # final embedding dim
P = 16            # number of spider patches == number of mesh-graph nodes
NP = 10           # real nodes per spider patch
NP_PAD = 16       # padded nodes per patch (2 full sublane tiles -> aligned reshape)
LANE = 128

# ---- packed parameter slab layout: one (PROWS, 128) f32 operand --------------
# Each parameter lives at rows [row, row+nrows) and lanes [0, ncols); rest is 0.
# All row offsets are multiples of 8 (sublane-tile aligned).
ROW_PWPHI, ROW_PBPHI = 0, 8
ROW_PWRHO, ROW_PBRHO = 16, 24
ROW_W1, ROW_B1 = 32, 48
ROW_W2, ROW_B2 = 56, 88
ROW_MWPHI, ROW_MBPHI = 96, 128
ROW_MWRHO, ROW_MBRHO = 136, 168
PROWS = 176

_SLAB_LAYOUT = {
    "p_wphi": ROW_PWPHI, "p_bphi": ROW_PBPHI,
    "p_wrho": ROW_PWRHO, "p_brho": ROW_PBRHO,
    "w1": ROW_W1, "b1": ROW_B1,
    "w2": ROW_W2, "b2": ROW_B2,
    "m_wphi": ROW_MWPHI, "m_bphi": ROW_MBPHI,
    "m_wrho": ROW_MWRHO, "m_brho": ROW_MBRHO,
}


def pack_params(params):
    """Pack all weights/biases into a single (PROWS, 128) f32 slab (zero padded)."""
    slab = jnp.zeros((PROWS, LANE), jnp.float32)
    for name, row in _SLAB_LAYOUT.items():
        arr = params[name].astype(jnp.float32)
        slab = slab.at[row:row + arr.shape[0], :arr.shape[1]].set(arr)
    return slab


# ------------------------------ fused Pallas kernel ---------------------------
# One grid step == one (mesh_graph, patches) instance.  Params are a single
# resident VMEM slab; all intermediates stay in vregs; output is a lane-dense
# (8, 128) tile (columns >= OUT_FEATS are exactly 0 because the padded rho
# weights/bias are 0 and relu(0) = 0).
def _mesh_network_urur_kernel(params_ref, feats_ref, a_ref, out_ref, *, n_valid):
    f32 = jnp.float32

    # --- unpack parameters from the packed slab (static ref slices) ---
    pwphi = params_ref[ROW_PWPHI:ROW_PWPHI + IN_DIM, 0:IN_DIM]
    pbphi = params_ref[ROW_PBPHI:ROW_PBPHI + 1, 0:IN_DIM]
    pwrho = params_ref[ROW_PWRHO:ROW_PWRHO + IN_DIM, 0:READOUT_DIM]
    pbrho = params_ref[ROW_PBRHO:ROW_PBRHO + 1, 0:READOUT_DIM]
    w1 = params_ref[ROW_W1:ROW_W1 + READOUT_DIM, 0:HIDDEN_DIM]
    b1 = params_ref[ROW_B1:ROW_B1 + 1, 0:HIDDEN_DIM]
    w2 = params_ref[ROW_W2:ROW_W2 + HIDDEN_DIM, 0:HIDDEN_DIM]
    b2 = params_ref[ROW_B2:ROW_B2 + 1, 0:HIDDEN_DIM]
    mwphi = params_ref[ROW_MWPHI:ROW_MWPHI + HIDDEN_DIM, 0:HIDDEN_DIM]
    mbphi = params_ref[ROW_MBPHI:ROW_MBPHI + 1, 0:HIDDEN_DIM]
    mwrho = params_ref[ROW_MWRHO:ROW_MWRHO + HIDDEN_DIM, :]   # (HIDDEN, 128), cols >= OUT_FEATS are 0
    mbrho = params_ref[ROW_MBRHO:ROW_MBRHO + 1, :]            # (1, 128), cols >= OUT_FEATS are 0

    # --- patch-level UniversalReadout (all patches of this graph at once) ---
    x = feats_ref[...]                                                       # (P*NP_PAD, IN_DIM)
    h = jnp.maximum(jnp.dot(x, pwphi, preferred_element_type=f32) + pbphi, 0.0)
    h = h.reshape(-1, NP_PAD, IN_DIM)                                        # (P, NP_PAD, IN_DIM), tile-aligned
    node = jax.lax.broadcasted_iota(jnp.int32, h.shape, 1)
    h = jnp.where(node < n_valid, h, 0.0)       # zero padded nodes (phi(0) = relu(bias) != 0)
    s = jnp.sum(h, axis=1)                      # dgl.sum_nodes -> (P, IN_DIM), XLU reduce
    readouts = jnp.maximum(jnp.dot(s, pwrho, preferred_element_type=f32) + pbrho, 0.0)

    # --- mesh-graph GCN: 2x GraphConv(norm='both', edge_weight) + ReLU ---
    # Dense form: H' = ReLU( A_norm @ (X @ W) + b ), A_norm precomputed in wrapper.
    A = a_ref[...]                                                           # (P, P)
    h1 = jnp.dot(A, jnp.dot(readouts, w1, preferred_element_type=f32),
                 preferred_element_type=f32) + b1
    h1 = jnp.maximum(h1, 0.0)
    h2 = jnp.dot(A, jnp.dot(h1, w2, preferred_element_type=f32),
                 preferred_element_type=f32) + b2
    h2 = jnp.maximum(h2, 0.0)

    # --- mesh-graph UniversalReadout ---
    phi = jnp.maximum(jnp.dot(h2, mwphi, preferred_element_type=f32) + mbphi, 0.0)
    ssum = jnp.sum(phi, axis=0, keepdims=True)                               # (1, HIDDEN)
    out = jnp.maximum(jnp.dot(ssum, mwrho, preferred_element_type=f32) + mbrho, 0.0)  # (1, 128)
    out_ref[...] = jnp.broadcast_to(out, (8, LANE))                          # full-tile, lane-dense store


@jax.jit
def mesh_network_urur_forward(params, patch_feats, a_norm):
    """Batched forward: patch_feats (B, P, NP, IN_DIM), a_norm (B, P, P) -> (B, OUT_FEATS)."""
    b, p, np_, din = patch_feats.shape
    assert p == P and din == IN_DIM and np_ <= NP_PAD

    # zero-pad patch node count to NP_PAD (masked post-phi inside the kernel)
    feats = jnp.pad(patch_feats.astype(jnp.float32),
                    ((0, 0), (0, 0), (0, NP_PAD - np_), (0, 0)))
    feats = feats.reshape(b, p * NP_PAD, din)
    slab = pack_params(params)

    flops = 2 * b * (p * NP_PAD * IN_DIM * IN_DIM
                     + p * IN_DIM * READOUT_DIM
                     + p * READOUT_DIM * HIDDEN_DIM + p * p * HIDDEN_DIM
                     + p * HIDDEN_DIM * HIDDEN_DIM + p * p * HIDDEN_DIM
                     + p * HIDDEN_DIM * HIDDEN_DIM
                     + HIDDEN_DIM * LANE)
    bytes_accessed = 4 * (PROWS * LANE + b * (p * NP_PAD * IN_DIM + p * p + 8 * LANE))

    out_pad = pl.pallas_call(
        functools.partial(_mesh_network_urur_kernel, n_valid=np_),
        grid=(b,),
        in_specs=[
            # parameter slab: same block for every grid step -> resident in VMEM
            pl.BlockSpec((PROWS, LANE), lambda i: (0, 0)),
            # per-graph flattened patch features
            pl.BlockSpec((None, p * NP_PAD, IN_DIM), lambda i: (i, 0, 0)),
            # per-graph normalized weighted adjacency
            pl.BlockSpec((None, p, p), lambda i: (i, 0, 0)),
        ],
        out_specs=pl.BlockSpec((None, 8, LANE), lambda i: (i, 0, 0)),
        out_shape=jax.ShapeDtypeStruct((b, 8, LANE), jnp.float32),
        compiler_params=pltpu.CompilerParams(dimension_semantics=("parallel",)),
        cost_estimate=pl.CostEstimate(flops=flops, transcendentals=0,
                                      bytes_accessed=bytes_accessed),
    )(slab, feats, a_norm.astype(jnp.float32))
    return out_pad[:, 0, :OUT_FEATS]


# --------------------------------- glue ---------------------------------------
def init_params(key):
    ks = jax.random.split(key, 6)
    scale = 0.2

    def lin(k, din, dout):
        kw, kb = jax.random.split(k)
        w = scale * jax.random.normal(kw, (din, dout), jnp.float32)
        b = scale * jax.random.normal(kb, (1, dout), jnp.float32)
        return w, b

    params = {}
    params["p_wphi"], params["p_bphi"] = lin(ks[0], IN_DIM, IN_DIM)
    params["p_wrho"], params["p_brho"] = lin(ks[1], IN_DIM, READOUT_DIM)
    params["w1"], params["b1"] = lin(ks[2], READOUT_DIM, HIDDEN_DIM)
    params["w2"], params["b2"] = lin(ks[3], HIDDEN_DIM, HIDDEN_DIM)
    params["m_wphi"], params["m_bphi"] = lin(ks[4], HIDDEN_DIM, HIDDEN_DIM)
    params["m_wrho"], params["m_brho"] = lin(ks[5], HIDDEN_DIM, OUT_FEATS)
    return params


def build_mesh_adjacency(num_nodes, key):
    """Deterministic ring mesh graph with edge weights (mesh_graph.edata['weights'])."""
    src = jnp.arange(num_nodes)
    dst = (src + 1) % num_nodes
    w = jax.random.uniform(key, (num_nodes,), jnp.float32, minval=0.5, maxval=1.5)
    a = jnp.zeros((num_nodes, num_nodes), jnp.float32)
    a = a.at[dst, src].set(w)
    a = a.at[src, dst].set(w)
    return a


def normalize_adjacency(a_w):
    # DGL GraphConv(norm='both', edge_weight): normalization uses structural
    # (unweighted) degrees clamped to >= 1; edge weights only scale messages.
    adj = (a_w != 0.0).astype(jnp.float32)
    in_deg = jnp.maximum(jnp.sum(adj, axis=1), 1.0)
    out_deg = jnp.maximum(jnp.sum(adj, axis=0), 1.0)
    return a_w * (1.0 / jnp.sqrt(in_deg))[:, None] * (1.0 / jnp.sqrt(out_deg))[None, :]


def reference_forward(params, patch_feats, a_norm):
    """Pure-JAX reference of the fused forward (eval dropout, identity permutation)."""
    def one(feats, a):
        h = jax.nn.relu(feats.reshape(-1, IN_DIM) @ params["p_wphi"] + params["p_bphi"])
        s = h.reshape(feats.shape[0], feats.shape[1], IN_DIM).sum(axis=1)
        r = jax.nn.relu(s @ params["p_wrho"] + params["p_brho"])
        h1 = jax.nn.relu(a @ (r @ params["w1"]) + params["b1"])
        h2 = jax.nn.relu(a @ (h1 @ params["w2"]) + params["b2"])
        phi = jax.nn.relu(h2 @ params["m_wphi"] + params["m_bphi"])
        ssum = phi.sum(axis=0, keepdims=True)
        return jax.nn.relu(ssum @ params["m_wrho"] + params["m_brho"])[0]
    return jax.vmap(one)(patch_feats, a_norm)


if __name__ == "__main__":
    B = 4
    key = jax.random.PRNGKey(0)
    k_params, k_feats, k_edges = jax.random.split(key, 3)

    params = init_params(k_params)
    patch_feats = jax.random.normal(k_feats, (B, P, NP, IN_DIM), jnp.float32)
    edge_keys = jax.random.split(k_edges, B)
    a_w = jnp.stack([build_mesh_adjacency(P, k) for k in edge_keys])
    a_norm = jax.vmap(normalize_adjacency)(a_w)

    out = mesh_network_urur_forward(params, patch_feats, a_norm)
    out = jax.block_until_ready(out)
    assert out.shape == (B, OUT_FEATS) and out.dtype == jnp.float32

    ref = reference_forward(params, patch_feats, a_norm)
    err = float(jnp.max(jnp.abs(out - ref)))
    assert err < 1e-3, f"kernel/reference mismatch: {err}"
    print("KERNEL_OK")
</pallas_src>

<mosaic_0001>
module attributes {stable_mosaic.version = 11 : i64} {
  func.func @_mesh_network_urur_kernel(%arg0: i32, %arg1: memref<176x128xf32, #tpu.memory_space<vmem>>, %arg2: memref<1x256x8xf32, #tpu.memory_space<vmem>>, %arg3: memref<1x16x16xf32, #tpu.memory_space<vmem>>, %arg4: memref<1x8x128xf32, #tpu.memory_space<vmem>>) attributes {dimension_semantics = [#tpu.dimension_semantics<parallel>], iteration_bounds = array<i64: 4>, scalar_prefetch = 0 : i64, scratch_operands = 0 : i64, tpu.core_type = #tpu.core_type<tc>, window_params = [{pipeline_mode = #tpu.pipeline_mode<synchronous>, transform_indices = @transform_0, window_bounds = array<i64: 176, 128>}, {transform_indices = @transform_1, window_bounds = array<i64: 1, 256, 8>}, {transform_indices = @transform_2, window_bounds = array<i64: 1, 16, 16>}, {transform_indices = @transform_3, window_bounds = array<i64: 1, 8, 128>}]} {
    %c0 = arith.constant 0 : index
    %c0_0 = arith.constant 0 : index
    %0 = vector.load %arg1[%c0, %c0_0] : memref<176x128xf32, #tpu.memory_space<vmem>>, vector<8x8xf32>
    %c8 = arith.constant 8 : index
    %c0_1 = arith.constant 0 : index
    %1 = vector.load %arg1[%c8, %c0_1] : memref<176x128xf32, #tpu.memory_space<vmem>>, vector<1x8xf32>
    %c16 = arith.constant 16 : index
    %c0_2 = arith.constant 0 : index
    %2 = vector.load %arg1[%c16, %c0_2] : memref<176x128xf32, #tpu.memory_space<vmem>>, vector<8x16xf32>
    %c24 = arith.constant 24 : index
    %c0_3 = arith.constant 0 : index
    %3 = vector.load %arg1[%c24, %c0_3] : memref<176x128xf32, #tpu.memory_space<vmem>>, vector<1x16xf32>
    %c32 = arith.constant 32 : index
    %c0_4 = arith.constant 0 : index
    %4 = vector.load %arg1[%c32, %c0_4] : memref<176x128xf32, #tpu.memory_space<vmem>>, vector<16x32xf32>
    %c48 = arith.constant 48 : index
    %c0_5 = arith.constant 0 : index
    %5 = vector.load %arg1[%c48, %c0_5] : memref<176x128xf32, #tpu.memory_space<vmem>>, vector<1x32xf32>
    %c56 = arith.constant 56 : index
    %c0_6 = arith.constant 0 : index
    %6 = vector.load %arg1[%c56, %c0_6] : memref<176x128xf32, #tpu.memory_space<vmem>>, vector<32x32xf32>
    %c88 = arith.constant 88 : index
    %c0_7 = arith.constant 0 : index
    %7 = vector.load %arg1[%c88, %c0_7] : memref<176x128xf32, #tpu.memory_space<vmem>>, vector<1x32xf32>
    %c96 = arith.constant 96 : index
    %c0_8 = arith.constant 0 : index
    %8 = vector.load %arg1[%c96, %c0_8] : memref<176x128xf32, #tpu.memory_space<vmem>>, vector<32x32xf32>
    %c128 = arith.constant 128 : index
    %c0_9 = arith.constant 0 : index
    %9 = vector.load %arg1[%c128, %c0_9] : memref<176x128xf32, #tpu.memory_space<vmem>>, vector<1x32xf32>
    %c136 = arith.constant 136 : index
    %c0_10 = arith.constant 0 : index
    %10 = vector.load %arg1[%c136, %c0_10] : memref<176x128xf32, #tpu.memory_space<vmem>>, vector<32x128xf32>
    %c168 = arith.constant 168 : index
    %c0_11 = arith.constant 0 : index
    %11 = vector.load %arg1[%c168, %c0_11] : memref<176x128xf32, #tpu.memory_space<vmem>>, vector<1x128xf32>
    %c0_12 = arith.constant 0 : index
    %c0_13 = arith.constant 0 : index
    %c0_14 = arith.constant 0 : index
    %12 = vector.load %arg2[%c0_12, %c0_13, %c0_14] : memref<1x256x8xf32, #tpu.memory_space<vmem>>, vector<1x256x8xf32>
    %13 = vector.shape_cast %12 : vector<1x256x8xf32> to vector<256x8xf32>
    %cst = arith.constant dense<0.000000e+00> : vector<256x8xf32>
    %14 = tpu.matmul %13, %0, %cst {dimension_numbers = #tpu.dot_dimension_numbers<[1], [0], [0], [1], [0, 0, 1, 1], [], []>} : vector<256x8xf32>, vector<8x8xf32>, vector<256x8xf32> -> vector<256x8xf32>
    %15 = vector.broadcast %1 : vector<1x8xf32> to vector<256x8xf32>
    %16 = arith.addf %14, %15 : vector<256x8xf32>
    %cst_15 = arith.constant 0.000000e+00 : f32
    %17 = vector.broadcast %cst_15 : f32 to vector<256x8xf32>
    %18 = arith.maximumf %16, %17 : vector<256x8xf32>
    %19 = vector.shape_cast %18 : vector<256x8xf32> to vector<16x16x8xf32>
    %20 = tpu.iota {dimensions = array<i32: 1>} : vector<16x16x8xi32>
    %c10_i32 = arith.constant 10 : i32
    %21 = vector.broadcast %c10_i32 : i32 to vector<16x16x8xi32>
    %22 = arith.cmpi slt, %20, %21 : vector<16x16x8xi32>
    %cst_16 = arith.constant 0.000000e+00 : f32
    %23 = vector.broadcast %cst_16 : f32 to vector<16x16x8xf32>
    %24 = arith.select %22, %19, %23 : vector<16x16x8xi1>, vector<16x16x8xf32>
    %cst_17 = arith.constant dense<0.000000e+00> : vector<16x8xf32>
    %25 = vector.multi_reduction <add>, %24, %cst_17 [1] : vector<16x16x8xf32> to vector<16x8xf32>
    %cst_18 = arith.constant dense<0.000000e+00> : vector<16x16xf32>
    %26 = tpu.matmul %25, %2, %cst_18 {dimension_numbers = #tpu.dot_dimension_numbers<[1], [0], [0], [1], [0, 0, 1, 1], [], []>} : vector<16x8xf32>, vector<8x16xf32>, vector<16x16xf32> -> vector<16x16xf32>
    %27 = vector.broadcast %3 : vector<1x16xf32> to vector<16x16xf32>
    %28 = arith.addf %26, %27 : vector<16x16xf32>
    %cst_19 = arith.constant 0.000000e+00 : f32
    %29 = vector.broadcast %cst_19 : f32 to vector<16x16xf32>
    %30 = arith.maximumf %28, %29 : vector<16x16xf32>
    %c0_20 = arith.constant 0 : index
    %c0_21 = arith.constant 0 : index
    %c0_22 = arith.constant 0 : index
    %31 = vector.load %arg3[%c0_20, %c0_21, %c0_22] : memref<1x16x16xf32, #tpu.memory_space<vmem>>, vector<1x16x16xf32>
    %32 = vector.shape_cast %31 : vector<1x16x16xf32> to vector<16x16xf32>
    %cst_23 = arith.constant dense<0.000000e+00> : vector<16x32xf32>
    %33 = tpu.matmul %30, %4, %cst_23 {dimension_numbers = #tpu.dot_dimension_numbers<[1], [0], [0], [1], [0, 0, 1, 1], [], []>} : vector<16x16xf32>, vector<16x32xf32>, vector<16x32xf32> -> vector<16x32xf32>
    %cst_24 = arith.constant dense<0.000000e+00> : vector<16x32xf32>
    %34 = tpu.matmul %32, %33, %cst_24 {dimension_numbers = #tpu.dot_dimension_numbers<[1], [0], [0], [1], [0, 0, 1, 1], [], []>} : vector<16x16xf32>, vector<16x32xf32>, vector<16x32xf32> -> vector<16x32xf32>
    %35 = vector.broadcast %5 : vector<1x32xf32> to vector<16x32xf32>
    %36 = arith.addf %34, %35 : vector<16x32xf32>
    %cst_25 = arith.constant 0.000000e+00 : f32
    %37 = vector.broadcast %cst_25 : f32 to vector<16x32xf32>
    %38 = arith.maximumf %36, %37 : vector<16x32xf32>
    %cst_26 = arith.constant dense<0.000000e+00> : vector<16x32xf32>
    %39 = tpu.matmul %38, %6, %cst_26 {dimension_numbers = #tpu.dot_dimension_numbers<[1], [0], [0], [1], [0, 0, 1, 1], [], []>} : vector<16x32xf32>, vector<32x32xf32>, vector<16x32xf32> -> vector<16x32xf32>
    %cst_27 = arith.constant dense<0.000000e+00> : vector<16x32xf32>
    %40 = tpu.matmul %32, %39, %cst_27 {dimension_numbers = #tpu.dot_dimension_numbers<[1], [0], [0], [1], [0, 0, 1, 1], [], []>} : vector<16x16xf32>, vector<16x32xf32>, vector<16x32xf32> -> vector<16x32xf32>
    %41 = vector.broadcast %7 : vector<1x32xf32> to vector<16x32xf32>
    %42 = arith.addf %40, %41 : vector<16x32xf32>
    %cst_28 = arith.constant 0.000000e+00 : f32
    %43 = vector.broadcast %cst_28 : f32 to vector<16x32xf32>
    %44 = arith.maximumf %42, %43 : vector<16x32xf32>
    %cst_29 = arith.constant dense<0.000000e+00> : vector<16x32xf32>
    %45 = tpu.matmul %44, %8, %cst_29 {dimension_numbers = #tpu.dot_dimension_numbers<[1], [0], [0], [1], [0, 0, 1, 1], [], []>} : vector<16x32xf32>, vector<32x32xf32>, vector<16x32xf32> -> vector<16x32xf32>
    %46 = vector.broadcast %9 : vector<1x32xf32> to vector<16x32xf32>
    %47 = arith.addf %45, %46 : vector<16x32xf32>
    %cst_30 = arith.constant 0.000000e+00 : f32
    %48 = vector.broadcast %cst_30 : f32 to vector<16x32xf32>
    %49 = arith.maximumf %47, %48 : vector<16x32xf32>
    %cst_31 = arith.constant dense<0.000000e+00> : vector<32xf32>
    %50 = vector.multi_reduction <add>, %49, %cst_31 [0] : vector<16x32xf32> to vector<32xf32>
    %51 = vector.shape_cast %50 : vector<32xf32> to vector<1x32xf32>
    %cst_32 = arith.constant dense<0.000000e+00> : vector<1x128xf32>
    %52 = tpu.matmul %51, %10, %cst_32 {dimension_numbers = #tpu.dot_dimension_numbers<[1], [0], [0], [1], [0, 0, 1, 1], [], []>} : vector<1x32xf32>, vector<32x128xf32>, vector<1x128xf32> -> vector<1x128xf32>
    %53 = arith.addf %52, %11 : vector<1x128xf32>
    %cst_33 = arith.constant 0.000000e+00 : f32
    %54 = vector.broadcast %cst_33 : f32 to vector<1x128xf32>
    %55 = arith.maximumf %53, %54 : vector<1x128xf32>
    %56 = vector.shape_cast %55 : vector<1x128xf32> to vector<1x128xf32>
    %57 = vector.broadcast %56 : vector<1x128xf32> to vector<8x128xf32>
    %c0_34 = arith.constant 0 : index
    %c0_35 = arith.constant 0 : index
    %c0_36 = arith.constant 0 : index
    %58 = vector.load %arg4[%c0_34, %c0_35, %c0_36] : memref<1x8x128xf32, #tpu.memory_space<vmem>>, vector<1x8x128xf32>
    %59 = vector.shape_cast %58 : vector<1x8x128xf32> to vector<8x128xf32>
    %60 = vector.shape_cast %57 : vector<8x128xf32> to vector<1x8x128xf32>
    tpu.vector_store %arg4[%c0_34, %c0_35, %c0_36], %60 {strides = array<i32>} : memref<1x8x128xf32, #tpu.memory_space<vmem>>, vector<1x8x128xf32>,
    return
  }
  func.func @transform_0(%arg0: i32) -> (i32, i32) {
    %c0_i32 = arith.constant 0 : i32
    %c0_i32_0 = arith.constant 0 : i32
    %c0_i32_1 = arith.constant 0 : i32
    return %c0_i32, %c0_i32_0 : i32, i32
  }
  func.func @transform_1(%arg0: i32) -> (i32, i32, i32) {
    %c0_i32 = arith.constant 0 : i32
    %c0_i32_0 = arith.constant 0 : i32
    %c0_i32_1 = arith.constant 0 : i32
    return %arg0, %c0_i32, %c0_i32_0 : i32, i32, i32
  }
  func.func @transform_2(%arg0: i32) -> (i32, i32, i32) {
    %c0_i32 = arith.constant 0 : i32
    %c0_i32_0 = arith.constant 0 : i32
    %c0_i32_1 = arith.constant 0 : i32
    return %arg0, %c0_i32, %c0_i32_0 : i32, i32, i32
  }
  func.func @transform_3(%arg0: i32) -> (i32, i32, i32) {
    %c0_i32 = arith.constant 0 : i32
    %c0_i32_0 = arith.constant 0 : i32
    %c0_i32_1 = arith.constant 0 : i32
    return %arg0, %c0_i32, %c0_i32_0 : i32, i32, i32
  }
}

</mosaic_0001>

<llo_original>
// kernel: mesh_network_urur_forward.1
$region0: #{mesh_network_urur_forward.1}
  #allocation0 [shape = 'u32[]', space=smem, size = 0x4, offset = 0x4, fixed_abs, tag = 'smem constant byte address 0x4 - core index']
  #allocation1 [shape = 'u32[72,128]{1,0:T(1,128)}', space=vmem, size = 0x9000, scoped, tag = 'internal scratch']
  %s0 = inlined_call_operand.vmem [shape: f32[176,128], index: 0, kind: input, shape index: {}]
  %s1 = inlined_call_operand.vmem [shape: f32[4,256,8], index: 1, kind: input, shape index: {}]
  %s2 = inlined_call_operand.vmem [shape: f32[4,16,16], index: 2, kind: input, shape index: {}]
  %s3 = inlined_call_operand.vmem [shape: f32[4,8,128], index: 3, kind: output, shape index: {}]
  %s4 = sld [smem:[#allocation0]]
  $region45: #{mesh_network_urur_forward.1} parent=0
    _
  %s6 = ssub.s32 1, %s4
  %s7 = scalar_select 0, %s6, %s4
  loop: start=0, step=1, limit=6
  $region2: #{mesh_network_urur_forward.1} parent=0 // loop_pre_header
    _
  $region3: #{mesh_network_urur_forward.1} parent=0 // loop_header
    %s9 = sphi 0, %s13
    %p10 = scmp.ge.s32.totalorder %s9, 6
    %s17 = sphi 0, %s17
    %s19 = sphi 0, %s17
    %s20 = sphi 0, %s19
    %s34 = sphi 0, %s20
    %s40 = sphi 0, %s42
    %s43 = sphi 0, %s40
    %s44 = sphi 0, %s43
    %s60 = sphi 0, %s44
    %s66 = sphi 0, %s68
    %s69 = sphi 0, %s66
    %s70 = sphi 0, %s69
    %s86 = sphi 0, %s70
    %s92 = sphi 0, %s94
    %s95 = sphi 0, %s92
    %s96 = sphi 0, %s95
    %s112 = sphi 0, %s96
  $region4: #{mesh_network_urur_forward.1} parent=0 // loop_header_branch
    %12 = sbr.rel (%p10) target = $region8
  $region5: #{mesh_network_urur_forward.1} parent=0 // loop_body
    %s14 = ssub.s32 %s9, 1
    %s15 = ssub.s32 %s9, 2
    %s16 = sadd.s32 %s9, 1
    %s18 = sadd.s32 %s17, 1
    %p21 = scmp.eq.s32.totalorder %s9, 3
    %p22 = scmp.ne.s32.totalorder %s17, %s19
    %p23 = scmp.eq.s32.totalorder %s9, 0
    %p24 = por %p22, %p23
    %p25 = scmp.ne.s32.totalorder %s17, %s19
    %p26 = scmp.eq.s32.totalorder %s14, 3
    %p27 = por %p25, %p26
    %p28 = scmp.ne.s32.totalorder %s19, %s20
    %p29 = scmp.eq.s32.totalorder %s14, 0
    %p30 = por %p28, %p29
    %p31 = scmp.ne.s32.totalorder %s19, %s20
    %p32 = scmp.eq.s32.totalorder %s15, 3
    %p33 = por %p31, %p32
    %p35 = scmp.ne.s32.totalorder %s20, %s34
    %p36 = scmp.eq.s32.totalorder %s15, 0
    %p37 = por %p35, %p36
    %s38 = ssub.s32 %s9, %s16
    %p39 = scmp.eq.s32.totalorder %s38, 0
    %s41 = sadd.s32 %s40, 1
    %s42 = scalar_select %p39, %s40, %s41
    %p45 = pneg %p39
    %p46 = scmp.eq.s32.totalorder %s9, 3
    %p47 = por %p45, %p46
    %p48 = scmp.ne.s32.totalorder %s40, %s43
    %p49 = scmp.eq.s32.totalorder %s9, 0
    %p50 = por %p48, %p49
    %p51 = scmp.ne.s32.totalorder %s40, %s43
    %p52 = scmp.eq.s32.totalorder %s14, 3
    %p53 = por %p51, %p52
    %p54 = scmp.ne.s32.totalorder %s43, %s44
    %p55 = scmp.eq.s32.totalorder %s14, 0
    %p56 = por %p54, %p55
    %p57 = scmp.ne.s32.totalorder %s43, %s44
    %p58 = scmp.eq.s32.totalorder %s15, 3
    %p59 = por %p57, %p58
    %p61 = scmp.ne.s32.totalorder %s44, %s60
    %p62 = scmp.eq.s32.totalorder %s15, 0
    %p63 = por %p61, %p62
    %s64 = ssub.s32 %s9, %s16
    %p65 = scmp.eq.s32.totalorder %s64, 0
    %s67 = sadd.s32 %s66, 1
    %s68 = scalar_select %p65, %s66, %s67
    %p71 = pneg %p65
    %p72 = scmp.eq.s32.totalorder %s9, 3
    %p73 = por %p71, %p72
    %p74 = scmp.ne.s32.totalorder %s66, %s69
    %p75 = scmp.eq.s32.totalorder %s9, 0
    %p76 = por %p74, %p75
    %p77 = scmp.ne.s32.totalorder %s66, %s69
    %p78 = scmp.eq.s32.totalorder %s14, 3
    %p79 = por %p77, %p78
    %p80 = scmp.ne.s32.totalorder %s69, %s70
    %p81 = scmp.eq.s32.totalorder %s14, 0
    %p82 = por %p80, %p81
    %p83 = scmp.ne.s32.totalorder %s69, %s70
    %p84 = scmp.eq.s32.totalorder %s15, 3
    %p85 = por %p83, %p84
    %p87 = scmp.ne.s32.totalorder %s70, %s86
    %p88 = scmp.eq.s32.totalorder %s15, 0
    %p89 = por %p87, %p88
    %s90 = ssub.s32 %s9, %s16
    %p91 = scmp.eq.s32.totalorder %s90, 0
    %s93 = sadd.s32 %s92, 1
    %s94 = scalar_select %p91, %s92, %s93
    %p97 = pneg %p91
    %p98 = scmp.eq.s32.totalorder %s9, 3
    %p99 = por %p97, %p98
    %p100 = scmp.ne.s32.totalorder %s92, %s95
    %p101 = scmp.eq.s32.totalorder %s9, 0
    %p102 = por %p100, %p101
    %p103 = scmp.ne.s32.totalorder %s92, %s95
    %p104 = scmp.eq.s32.totalorder %s14, 3
    %p105 = por %p103, %p104
    %p106 = scmp.ne.s32.totalorder %s95, %s96
    %p107 = scmp.eq.s32.totalorder %s14, 0
    %p108 = por %p106, %p107
    %p109 = scmp.ne.s32.totalorder %s95, %s96
    %p110 = scmp.eq.s32.totalorder %s15, 3
    %p111 = por %p109, %p110
    %p113 = scmp.ne.s32.totalorder %s96, %s112
    %p114 = scmp.eq.s32.totalorder %s15, 0
    %p115 = por %p113, %p114
    %p116 = scmp.le.s32.totalorder 1, %s9
    %p117 = scmp.lt.s32.totalorder %s9, 5
    %p118 = pnand %p116, %p117
    %p119 = pneg %p118
    // Predicated region
    $region9: #{mesh_network_urur_forward.1} parent=5 // pred_check
      _
    $region10: #{mesh_network_urur_forward.1} parent=5 // pred_check_branch
      %121 = sbr.rel (%p118) target = $region12
    $region11: #{mesh_network_urur_forward.1} parent=5 // pred_region
      %s122 = ssub.s32 %s9, 1
      // Predicated region
      $region13: #{mesh_network_urur_forward.1} parent=11 // pred_check
        %p123 = pneg %p30
      $region14: #{mesh_network_urur_forward.1} parent=11 // pred_check_branch
        %125 = sbr.rel (%p123) target = $region16
      $region15: #{mesh_network_urur_forward.1} parent=11 // pred_region
        _
      $region16: #{mesh_network_urur_forward.1} parent=11 // pred_fallthru
        _
    $region12: #{mesh_network_urur_forward.1} parent=5 // pred_fallthru
      _
    %p126 = scmp.lt.s32.totalorder %s9, 4
    // Predicated region
    $region17: #{mesh_network_urur_forward.1} parent=5 // pred_check
      %p127 = pneg %p126
    $region18: #{mesh_network_urur_forward.1} parent=5 // pred_check_branch
      %129 = sbr.rel (%p127) target = $region20
    $region19: #{mesh_network_urur_forward.1} parent=5 // pred_region
      // Predicated region
      $region21: #{mesh_network_urur_forward.1} parent=19 // pred_check
        %p130 = pneg %p50
      $region22: #{mesh_network_urur_forward.1} parent=19 // pred_check_branch
        %132 = sbr.rel (%p130) target = $region24
      $region23: #{mesh_network_urur_forward.1} parent=19 // pred_region
        %p133 = scmp.lt.s32.totalorder %s9, 3
        %s134 = scalar_select %p133, %s9, 3
        %s135 = smul.addr %s134, 32
        %s136 = smul.addr %s135, 8
        %s137 = scalar_lea.vmem %s1, %s136
      $region24: #{mesh_network_urur_forward.1} parent=19 // pred_fallthru
        _
      // Predicated region
      $region25: #{mesh_network_urur_forward.1} parent=19 // pred_check
        %p138 = pneg %p76
      $region26: #{mesh_network_urur_forward.1} parent=19 // pred_check_branch
        %140 = sbr.rel (%p138) target = $region28
      $region27: #{mesh_network_urur_forward.1} parent=19 // pred_region
        %p141 = scmp.lt.s32.totalorder %s9, 3
        %s142 = scalar_select %p141, %s9, 3
        %s143 = smul.addr %s142, 2
        %s144 = smul.addr %s143, 8
        %s145 = scalar_lea.vmem %s2, %s144
      $region28: #{mesh_network_urur_forward.1} parent=19 // pred_fallthru
        _
    $region20: #{mesh_network_urur_forward.1} parent=5 // pred_fallthru
      _
    %p146 = scmp.le.s32.totalorder 1, %s9
    %p147 = scmp.lt.s32.totalorder %s9, 5
    %p148 = pnand %p146, %p147
    %p149 = pneg %p148
    // Predicated region
    $region29: #{mesh_network_urur_forward.1} parent=5 // pred_check
      _
    $region30: #{mesh_network_urur_forward.1} parent=5 // pred_check_branch
      %151 = sbr.rel (%p148) target = $region32
    $region31: #{mesh_network_urur_forward.1} parent=5 // pred_region
      %s152 = ssub.s32 %s9, 1
      %p153 = pneg %p30
      %p154 = pneg %p27
      %p155 = scmp.lt.s32.totalorder %s14, 3
      %s156 = scalar_select %p155, %s14, 3
      %s157 = smul.addr %s156, 32
      %s158 = smul.addr %s157, 8
      %s159 = scalar_lea.vmem %s1, %s158
      %p160 = pneg %p56
      %p161 = pneg %p53
      %p162 = scmp.lt.s32.totalorder %s14, 3
      %s163 = scalar_select %p162, %s14, 3
      %s164 = smul.addr %s163, 2
      %s165 = smul.addr %s164, 8
      %s166 = scalar_lea.vmem %s2, %s165
      %p167 = pneg %p82
      %p168 = pneg %p79
      %p169 = pneg %p108
      %p170 = pneg %p105
      %p171 = scmp.lt.s32.totalorder %s14, 3
      %s172 = scalar_select %p171, %s14, 3
      %s173 = smul.addr %s172, 8
      %s174 = scalar_lea.vmem %s3, %s173
      %p175 = scmp.lt.s32.totalorder %s14, 3
      %s176 = scalar_select %p175, %s14, 3
      %s177 = smul.addr %s176, 32
      %s178 = smul.addr %s177, 8
      %s179 = scalar_lea.vmem %s1, %s178
      %p180 = scmp.lt.s32.totalorder %s14, 3
      %s181 = scalar_select %p180, %s14, 3
      %s182 = smul.addr %s181, 2
      %s183 = smul.addr %s182, 8
      %s184 = scalar_lea.vmem %s2, %s183
      %p185 = scmp.lt.s32.totalorder %s14, 3
      %s186 = scalar_select %p185, %s14, 3
      %s187 = smul.addr %s186, 8
      %s188 = scalar_lea.vmem %s3, %s187
      %v189 = vld [vmem:[%s0] sm:$0xff]
      %v190 = vld [vmem:[%s0 + $0x8] sm:$0x1]
      %v191 = vld [vmem:[%s0 + $0x10] sm:$0xff]
      %v192 = vld [vmem:[%s0 + $0x18] sm:$0x1]
      %v193 = vld [vmem:[%s0 + $0x20] sm:$0xff]
      %v194 = vld [vmem:[%s0 + $0x28] sm:$0xff]
      %v195 = vld [vmem:[%s0 + $0x30] sm:$0x1]
      %v196 = vld [vmem:[%s0 + $0x38] sm:$0xff]
      %v197 = vld [vmem:[%s0 + $0x40] sm:$0xff]
      %v198 = vld [vmem:[%s0 + $0x48] sm:$0xff]
      %v199 = vld [vmem:[%s0 + $0x50] sm:$0xff]
      %v200 = vld [vmem:[%s0 + $0x58] sm:$0x1]
      %v201 = vld [vmem:[%s0 + $0x60] sm:$0xff]
      %v202 = vld [vmem:[%s0 + $0x68] sm:$0xff]
      %v203 = vld [vmem:[%s0 + $0x70] sm:$0xff]
      %v204 = vld [vmem:[%s0 + $0x78] sm:$0xff]
      %v205 = vld [vmem:[%s0 + $0x80] sm:$0x1]
      %v206 = vld [vmem:[%s0 + $0x88] sm:$0xff]
      %v207 = vld [vmem:[%s0 + $0x90] sm:$0xff]
      %v208 = vld [vmem:[%s0 + $0x98] sm:$0xff]
      %v209 = vld [vmem:[%s0 + $0xa0] sm:$0xff]
      %v210 = vld [vmem:[%s0 + $0xa8] sm:$0x1]
      %v211 = vld [vmem:[%s179] sm:$0xff]
      %v212 = vld [vmem:[%s179 + $0x8] sm:$0xff]
      %v213 = vld [vmem:[%s179 + $0x10] sm:$0xff]
      %v214 = vld [vmem:[%s179 + $0x18] sm:$0xff]
      %v215 = vld [vmem:[%s179 + $0x20] sm:$0xff]
      %v216 = vld [vmem:[%s179 + $0x28] sm:$0xff]
      %v217 = vld [vmem:[%s179 + $0x30] sm:$0xff]
      %v218 = vld [vmem:[%s179 + $0x38] sm:$0xff]
      %v219 = vld [vmem:[%s179 + $0x40] sm:$0xff]
      %v220 = vld [vmem:[%s179 + $0x48] sm:$0xff]
      %v221 = vld [vmem:[%s179 + $0x50] sm:$0xff]
      %v222 = vld [vmem:[%s179 + $0x58] sm:$0xff]
      %v223 = vld [vmem:[%s179 + $0x60] sm:$0xff]
      %v224 = vld [vmem:[%s179 + $0x68] sm:$0xff]
      %v225 = vld [vmem:[%s179 + $0x70] sm:$0xff]
      %v226 = vld [vmem:[%s179 + $0x78] sm:$0xff]
      %v227 = vld [vmem:[%s179 + $0x80] sm:$0xff]
      %v228 = vld [vmem:[%s179 + $0x88] sm:$0xff]
      %v229 = vld [vmem:[%s179 + $0x90] sm:$0xff]
      %v230 = vld [vmem:[%s179 + $0x98] sm:$0xff]
      %v231 = vld [vmem:[%s179 + $0xa0] sm:$0xff]
      %v232 = vld [vmem:[%s179 + $0xa8] sm:$0xff]
      %v233 = vld [vmem:[%s179 + $0xb0] sm:$0xff]
      %v234 = vld [vmem:[%s179 + $0xb8] sm:$0xff]
      %v235 = vld [vmem:[%s179 + $0xc0] sm:$0xff]
      %v236 = vld [vmem:[%s179 + $0xc8] sm:$0xff]
      %v237 = vld [vmem:[%s179 + $0xd0] sm:$0xff]
      %v238 = vld [vmem:[%s179 + $0xd8] sm:$0xff]
      %v239 = vld [vmem:[%s179 + $0xe0] sm:$0xff]
      %v240 = vld [vmem:[%s179 + $0xe8] sm:$0xff]
      %v241 = vld [vmem:[%s179 + $0xf0] sm:$0xff]
      %v242 = vld [vmem:[%s179 + $0xf8] sm:$0xff]
      %v243 = vperm.slane %v190, 0
      %vm244 = vcmask 64512
      %v246 = vsel %vm244, %v211, 0
      %v249 = vsel %vm244, %v212, 0
      %v252 = vsel %vm244, %v213, 0
      %v255 = vsel %vm244, %v214, 0
      %v258 = vsel %vm244, %v215, 0
      %v261 = vsel %vm244, %v216, 0
      %v264 = vsel %vm244, %v217, 0
      %v267 = vsel %vm244, %v218, 0
      %v270 = vsel %vm244, %v219, 0
      %v273 = vsel %vm244, %v220, 0
      %v276 = vsel %vm244, %v221, 0
      %v279 = vsel %vm244, %v222, 0
      %v282 = vsel %vm244, %v223, 0
      %v285 = vsel %vm244, %v224, 0
      %v288 = vsel %vm244, %v225, 0
      %v291 = vsel %vm244, %v226, 0
      %v294 = vsel %vm244, %v227, 0
      %v297 = vsel %vm244, %v228, 0
      %v300 = vsel %vm244, %v229, 0
      %v303 = vsel %vm244, %v230, 0
      %v306 = vsel %vm244, %v231, 0
      %v309 = vsel %vm244, %v232, 0
      %v312 = vsel %vm244, %v233, 0
      %v315 = vsel %vm244, %v234, 0
      %v318 = vsel %vm244, %v235, 0
      %v321 = vsel %vm244, %v236, 0
      %v324 = vsel %vm244, %v237, 0
      %v327 = vsel %vm244, %v238, 0
      %v330 = vsel %vm244, %v239, 0
      %v333 = vsel %vm244, %v240, 0
      %v336 = vsel %vm244, %v241, 0
      %v339 = vsel %vm244, %v242, 0
      %341 = vmatpush.msra.mxu0 0.0
      %342 = vmatpush.msra.mxu0 0.0
      %343 = vmatpush.msra.mxu0 0.0
      %344 = vmatpush.msra.mxu0 0.0
      %345 = vmatpush.msra.mxu0 0.0
      %346 = vmatpush.msra.mxu0 0.0
      %347 = vmatpush.msra.mxu0 0.0
      %348 = vmatpush.msra.mxu0 0.0
      %349 = vmatpush.msra.mxu0 0.0
      %350 = vmatpush.msra.mxu0 0.0
      %351 = vmatpush.msra.mxu0 0.0
      %352 = vmatpush.msra.mxu0 0.0
      %353 = vmatpush.msra.mxu0 0.0
      %354 = vmatpush.msra.mxu0 0.0
      %355 = vmatpush.msra.mxu0 0.0
      %356 = vmatpush.msra.mxu0 %v189
      %357 = vmatmul.f32.gmra.mxu0 %v246
      %v358 = vpop.f32.mrf.mxu0
      %v359 = vadd.f32 %v243, %v358
      %360 = vmatmul.f32.gmra.mxu0 %v249
      %v361 = vpop.f32.mrf.mxu0
      %v362 = vadd.f32 %v243, %v361
      %363 = vmatmul.f32.gmra.mxu0 %v252
      %v364 = vpop.f32.mrf.mxu0
      %v365 = vadd.f32 %v243, %v364
      %366 = vmatmul.f32.gmra.mxu0 %v255
      %v367 = vpop.f32.mrf.mxu0
      %v368 = vadd.f32 %v243, %v367
      %369 = vmatmul.f32.gmra.mxu0 %v258
      %v370 = vpop.f32.mrf.mxu0
      %v371 = vadd.f32 %v243, %v370
      %372 = vmatmul.f32.gmra.mxu0 %v261
      %v373 = vpop.f32.mrf.mxu0
      %v374 = vadd.f32 %v243, %v373
      %375 = vmatmul.f32.gmra.mxu0 %v264
      %v376 = vpop.f32.mrf.mxu0
      %v377 = vadd.f32 %v243, %v376
      %378 = vmatmul.f32.gmra.mxu0 %v267
      %v379 = vpop.f32.mrf.mxu0
      %v380 = vadd.f32 %v243, %v379
      %381 = vmatmul.f32.gmra.mxu0 %v270
      %v382 = vpop.f32.mrf.mxu0
      %v383 = vadd.f32 %v243, %v382
      %384 = vmatmul.f32.gmra.mxu0 %v273
      %v385 = vpop.f32.mrf.mxu0
      %v386 = vadd.f32 %v243, %v385
      %387 = vmatmul.f32.gmra.mxu0 %v276
      %v388 = vpop.f32.mrf.mxu0
      %v389 = vadd.f32 %v243, %v388
      %390 = vmatmul.f32.gmra.mxu0 %v279
      %v391 = vpop.f32.mrf.mxu0
      %v392 = vadd.f32 %v243, %v391
      %393 = vmatmul.f32.gmra.mxu0 %v282
      %v394 = vpop.f32.mrf.mxu0
      %v395 = vadd.f32 %v243, %v394
      %396 = vmatmul.f32.gmra.mxu0 %v285
      %v397 = vpop.f32.mrf.mxu0
      %v398 = vadd.f32 %v243, %v397
      %399 = vmatmul.f32.gmra.mxu0 %v288
      %v400 = vpop.f32.mrf.mxu0
      %v401 = vadd.f32 %v243, %v400
      %402 = vmatmul.f32.gmra.mxu0 %v291
      %v403 = vpop.f32.mrf.mxu0
      %v404 = vadd.f32 %v243, %v403
      %405 = vmatmul.f32.gmra.mxu0 %v294
      %v406 = vpop.f32.mrf.mxu0
      %v407 = vadd.f32 %v243, %v406
      %408 = vmatmul.f32.gmra.mxu0 %v297
      %v409 = vpop.f32.mrf.mxu0
      %v410 = vadd.f32 %v243, %v409
      %411 = vmatmul.f32.gmra.mxu0 %v300
      %v412 = vpop.f32.mrf.mxu0
      %v413 = vadd.f32 %v243, %v412
      %414 = vmatmul.f32.gmra.mxu0 %v303
      %v415 = vpop.f32.mrf.mxu0
      %v416 = vadd.f32 %v243, %v415
      %417 = vmatmul.f32.gmra.mxu0 %v306
      %v418 = vpop.f32.mrf.mxu0
      %v419 = vadd.f32 %v243, %v418
      %420 = vmatmul.f32.gmra.mxu0 %v309
      %v421 = vpop.f32.mrf.mxu0
      %v422 = vadd.f32 %v243, %v421
      %423 = vmatmul.f32.gmra.mxu0 %v312
      %v424 = vpop.f32.mrf.mxu0
      %v425 = vadd.f32 %v243, %v424
      %426 = vmatmul.f32.gmra.mxu0 %v315
      %v427 = vpop.f32.mrf.mxu0
      %v428 = vadd.f32 %v243, %v427
      %429 = vmatmul.f32.gmra.mxu0 %v318
      %v430 = vpop.f32.mrf.mxu0
      %v431 = vadd.f32 %v243, %v430
      %432 = vmatmul.f32.gmra.mxu0 %v321
      %v433 = vpop.f32.mrf.mxu0
      %v434 = vadd.f32 %v243, %v433
      %435 = vmatmul.f32.gmra.mxu0 %v324
      %v436 = vpop.f32.mrf.mxu0
      %v437 = vadd.f32 %v243, %v436
      %438 = vmatmul.f32.gmra.mxu0 %v327
      %v439 = vpop.f32.mrf.mxu0
      %v440 = vadd.f32 %v243, %v439
      %441 = vmatmul.f32.gmra.mxu0 %v330
      %v442 = vpop.f32.mrf.mxu0
      %v443 = vadd.f32 %v243, %v442
      %444 = vmatmul.f32.gmra.mxu0 %v333
      %v445 = vpop.f32.mrf.mxu0
      %v446 = vadd.f32 %v243, %v445
      %447 = vmatmul.f32.gmra.mxu0 %v336
      %v448 = vpop.f32.mrf.mxu0
      %v449 = vadd.f32 %v243, %v448
      %450 = vmatmul.f32.gmra.mxu0 %v339
      %v451 = vpop.f32.mrf.mxu0
      %v452 = vadd.f32 %v243, %v451
      %453 = vdwg.mxu0
      %v454 = vmax.f32 %v359, 0.0
      %v455 = vmax.f32 %v362, 0.0
      %v456 = vmax.f32 %v365, 0.0
      %v457 = vmax.f32 %v368, 0.0
      %v458 = vmax.f32 %v371, 0.0
      %v459 = vmax.f32 %v374, 0.0
      %v460 = vmax.f32 %v377, 0.0
      %v461 = vmax.f32 %v380, 0.0
      %v462 = vmax.f32 %v383, 0.0
      %v463 = vmax.f32 %v386, 0.0
      %v464 = vmax.f32 %v389, 0.0
      %v465 = vmax.f32 %v392, 0.0
      %v466 = vmax.f32 %v395, 0.0
      %v467 = vmax.f32 %v398, 0.0
      %v468 = vmax.f32 %v401, 0.0
      %v469 = vmax.f32 %v404, 0.0
      %v470 = vmax.f32 %v407, 0.0
      %v471 = vmax.f32 %v410, 0.0
      %v472 = vmax.f32 %v413, 0.0
      %v473 = vmax.f32 %v416, 0.0
      %v474 = vmax.f32 %v419, 0.0
      %v475 = vmax.f32 %v422, 0.0
      %v476 = vmax.f32 %v425, 0.0
      %v477 = vmax.f32 %v428, 0.0
      %v478 = vmax.f32 %v431, 0.0
      %v479 = vmax.f32 %v434, 0.0
      %v480 = vmax.f32 %v437, 0.0
      %v481 = vmax.f32 %v440, 0.0
      %v482 = vmax.f32 %v443, 0.0
      %v483 = vmax.f32 %v446, 0.0
      %v484 = vmax.f32 %v449, 0.0
      %v485 = vmax.f32 %v452, 0.0
      %v486 = vlaneseq
      %v487 = vshrl.u32 %v486, 7
      %v488 = vadd.s32 %v487, 8
      %vm489 = vcmp.lt.s32.totalorder %v487, 10
      %vm490 = vcmp.lt.s32.totalorder %v488, 10
      %v491 = vsel %vm489, %v454, 0.0
      %v492 = vsel %vm490, %v455, 0.0
      %v493 = vsel %vm489, %v456, 0.0
      %v494 = vsel %vm490, %v457, 0.0
      %v495 = vsel %vm489, %v458, 0.0
      %v496 = vsel %vm490, %v459, 0.0
      %v497 = vsel %vm489, %v460, 0.0
      %v498 = vsel %vm490, %v461, 0.0
      %v499 = vsel %vm489, %v462, 0.0
      %v500 = vsel %vm490, %v463, 0.0
      %v501 = vsel %vm489, %v464, 0.0
      %v502 = vsel %vm490, %v465, 0.0
      %v503 = vsel %vm489, %v466, 0.0
      %v504 = vsel %vm490, %v467, 0.0
      %v505 = vsel %vm489, %v468, 0.0
      %v506 = vsel %vm490, %v469, 0.0
      %v507 = vsel %vm489, %v470, 0.0
      %v508 = vsel %vm490, %v471, 0.0
      %v509 = vsel %vm489, %v472, 0.0
      %v510 = vsel %vm490, %v473, 0.0
      %v511 = vsel %vm489, %v474, 0.0
      %v512 = vsel %vm490, %v475, 0.0
      %v513 = vsel %vm489, %v476, 0.0
      %v514 = vsel %vm490, %v477, 0.0
      %v515 = vsel %vm489, %v478, 0.0
      %v516 = vsel %vm490, %v479, 0.0
      %v517 = vsel %vm489, %v480, 0.0
      %v518 = vsel %vm490, %v481, 0.0
      %v519 = vsel %vm489, %v482, 0.0
      %v520 = vsel %vm490, %v483, 0.0
      %v521 = vsel %vm489, %v484, 0.0
      %v522 = vsel %vm490, %v485, 0.0
      %v523 = vsel %vm244, %v491, 0.0
      %v524 = vsel %vm244, %v492, 0.0
      %v525 = vadd.f32 %v523, %v524
      %v526 = vrot.slane %v525, 4
      %v527 = vadd.f32 %v525, %v526
      %v528 = vrot.slane %v527, 2
      %v529 = vadd.f32 %v527, %v528
      %v530 = vrot.slane %v529, 1
      %v531 = vadd.f32 %v529, %v530
      %v532 = vsel %vm244, %v493, 0.0
      %v533 = vsel %vm244, %v494, 0.0
      %v534 = vadd.f32 %v532, %v533
      %v535 = vrot.slane %v534, 4
      %v536 = vadd.f32 %v534, %v535
      %v537 = vrot.slane %v536, 2
      %v538 = vadd.f32 %v536, %v537
      %v539 = vrot.slane %v538, 1
      %v540 = vadd.f32 %v538, %v539
      %v541 = vsel %vm244, %v495, 0.0
      %v542 = vsel %vm244, %v496, 0.0
      %v543 = vadd.f32 %v541, %v542
      %v544 = vrot.slane %v543, 4
      %v545 = vadd.f32 %v543, %v544
      %v546 = vrot.slane %v545, 2
      %v547 = vadd.f32 %v545, %v546
      %v548 = vrot.slane %v547, 1
      %v549 = vadd.f32 %v547, %v548
      %v550 = vsel %vm244, %v497, 0.0
      %v551 = vsel %vm244, %v498, 0.0
      %v552 = vadd.f32 %v550, %v551
      %v553 = vrot.slane %v552, 4
      %v554 = vadd.f32 %v552, %v553
      %v555 = vrot.slane %v554, 2
      %v556 = vadd.f32 %v554, %v555
      %v557 = vrot.slane %v556, 1
      %v558 = vadd.f32 %v556, %v557
      %v559 = vsel %vm244, %v499, 0.0
      %v560 = vsel %vm244, %v500, 0.0
      %v561 = vadd.f32 %v559, %v560
      %v562 = vrot.slane %v561, 4
      %v563 = vadd.f32 %v561, %v562
      %v564 = vrot.slane %v563, 2
      %v565 = vadd.f32 %v563, %v564
      %v566 = vrot.slane %v565, 1
      %v567 = vadd.f32 %v565, %v566
      %v568 = vsel %vm244, %v501, 0.0
      %v569 = vsel %vm244, %v502, 0.0
      %v570 = vadd.f32 %v568, %v569
      %v571 = vrot.slane %v570, 4
      %v572 = vadd.f32 %v570, %v571
      %v573 = vrot.slane %v572, 2
      %v574 = vadd.f32 %v572, %v573
      %v575 = vrot.slane %v574, 1
      %v576 = vadd.f32 %v574, %v575
      %v577 = vsel %vm244, %v503, 0.0
      %v578 = vsel %vm244, %v504, 0.0
      %v579 = vadd.f32 %v577, %v578
      %v580 = vrot.slane %v579, 4
      %v581 = vadd.f32 %v579, %v580
      %v582 = vrot.slane %v581, 2
      %v583 = vadd.f32 %v581, %v582
      %v584 = vrot.slane %v583, 1
      %v585 = vadd.f32 %v583, %v584
      %v586 = vsel %vm244, %v505, 0.0
      %v587 = vsel %vm244, %v506, 0.0
      %v588 = vadd.f32 %v586, %v587
      %v589 = vrot.slane %v588, 4
      %v590 = vadd.f32 %v588, %v589
      %v591 = vrot.slane %v590, 2
      %v592 = vadd.f32 %v590, %v591
      %v593 = vrot.slane %v592, 1
      %v594 = vadd.f32 %v592, %v593
      %v595 = vsel %vm244, %v507, 0.0
      %v596 = vsel %vm244, %v508, 0.0
      %v597 = vadd.f32 %v595, %v596
      %v598 = vrot.slane %v597, 4
      %v599 = vadd.f32 %v597, %v598
      %v600 = vrot.slane %v599, 2
      %v601 = vadd.f32 %v599, %v600
      %v602 = vrot.slane %v601, 1
      %v603 = vadd.f32 %v601, %v602
      %v604 = vsel %vm244, %v509, 0.0
      %v605 = vsel %vm244, %v510, 0.0
      %v606 = vadd.f32 %v604, %v605
      %v607 = vrot.slane %v606, 4
      %v608 = vadd.f32 %v606, %v607
      %v609 = vrot.slane %v608, 2
      %v610 = vadd.f32 %v608, %v609
      %v611 = vrot.slane %v610, 1
      %v612 = vadd.f32 %v610, %v611
      %v613 = vsel %vm244, %v511, 0.0
      %v614 = vsel %vm244, %v512, 0.0
      %v615 = vadd.f32 %v613, %v614
      %v616 = vrot.slane %v615, 4
      %v617 = vadd.f32 %v615, %v616
      %v618 = vrot.slane %v617, 2
      %v619 = vadd.f32 %v617, %v618
      %v620 = vrot.slane %v619, 1
      %v621 = vadd.f32 %v619, %v620
      %v622 = vsel %vm244, %v513, 0.0
      %v623 = vsel %vm244, %v514, 0.0
      %v624 = vadd.f32 %v622, %v623
      %v625 = vrot.slane %v624, 4
      %v626 = vadd.f32 %v624, %v625
      %v627 = vrot.slane %v626, 2
      %v628 = vadd.f32 %v626, %v627
      %v629 = vrot.slane %v628, 1
      %v630 = vadd.f32 %v628, %v629
      %v631 = vsel %vm244, %v515, 0.0
      %v632 = vsel %vm244, %v516, 0.0
      %v633 = vadd.f32 %v631, %v632
      %v634 = vrot.slane %v633, 4
      %v635 = vadd.f32 %v633, %v634
      %v636 = vrot.slane %v635, 2
      %v637 = vadd.f32 %v635, %v636
      %v638 = vrot.slane %v637, 1
      %v639 = vadd.f32 %v637, %v638
      %v640 = vsel %vm244, %v517, 0.0
      %v641 = vsel %vm244, %v518, 0.0
      %v642 = vadd.f32 %v640, %v641
      %v643 = vrot.slane %v642, 4
      %v644 = vadd.f32 %v642, %v643
      %v645 = vrot.slane %v644, 2
      %v646 = vadd.f32 %v644, %v645
      %v647 = vrot.slane %v646, 1
      %v648 = vadd.f32 %v646, %v647
      %v649 = vsel %vm244, %v519, 0.0
      %v650 = vsel %vm244, %v520, 0.0
      %v651 = vadd.f32 %v649, %v650
      %v652 = vrot.slane %v651, 4
      %v653 = vadd.f32 %v651, %v652
      %v654 = vrot.slane %v653, 2
      %v655 = vadd.f32 %v653, %v654
      %v656 = vrot.slane %v655, 1
      %v657 = vadd.f32 %v655, %v656
      %v658 = vsel %vm244, %v521, 0.0
      %v659 = vsel %vm244, %v522, 0.0
      %v660 = vadd.f32 %v658, %v659
      %v661 = vrot.slane %v660, 4
      %v662 = vadd.f32 %v660, %v661
      %v663 = vrot.slane %v662, 2
      %v664 = vadd.f32 %v662, %v663
      %v665 = vrot.slane %v664, 1
      %v666 = vadd.f32 %v664, %v665
      %v667 = vperm.slane %v192, 0
      %vm684 = vcmask 1041409
      %v685 = vsel %vm684, %v540, %v531
      %vm686 = vcmask 1042434
      %v687 = vsel %vm686, %v549, %v685
      %vm688 = vcmask 1043459
      %v689 = vsel %vm688, %v558, %v687
      %vm690 = vcmask 1044484
      %v691 = vsel %vm690, %v567, %v689
      %vm692 = vcmask 1045509
      %v693 = vsel %vm692, %v576, %v691
      %vm694 = vcmask 1046534
      %v695 = vsel %vm694, %v585, %v693
      %vm696 = vcmask 1047559
      %v697 = vsel %vm696, %v594, %v695
      %v698 = vsel %vm684, %v612, %v603
      %v699 = vsel %vm686, %v621, %v698
      %v700 = vsel %vm688, %v630, %v699
      %v701 = vsel %vm690, %v639, %v700
      %v702 = vsel %vm692, %v648, %v701
      %v703 = vsel %vm694, %v657, %v702
      %v704 = vsel %vm696, %v666, %v703
      %v705 = vsel %vm244, %v697, 0
      %v707 = vsel %vm244, %v704, 0
      %709 = vmatpush.msra.mxu0 0.0
      %710 = vmatpush.msra.mxu0 0.0
      %711 = vmatpush.msra.mxu0 0.0
      %712 = vmatpush.msra.mxu0 0.0
      %713 = vmatpush.msra.mxu0 0.0
      %714 = vmatpush.msra.mxu0 0.0
      %715 = vmatpush.msra.mxu0 0.0
      %716 = vmatpush.msra.mxu0 0.0
      %717 = vmatpush.msra.mxu0 0.0
      %718 = vmatpush.msra.mxu0 0.0
      %719 = vmatpush.msra.mxu0 0.0
      %720 = vmatpush.msra.mxu0 0.0
      %721 = vmatpush.msra.mxu0 0.0
      %722 = vmatpush.msra.mxu0 0.0
      %723 = vmatpush.msra.mxu0 0.0
      %724 = vmatpush.msra.mxu0 %v191
      %725 = vmatmul.f32.gmra.mxu0 %v705
      %v726 = vpop.f32.mrf.mxu0
      %v727 = vadd.f32 %v667, %v726
      %728 = vmatmul.f32.gmra.mxu0 %v707
      %v729 = vpop.f32.mrf.mxu0
      %v730 = vadd.f32 %v667, %v729
      %731 = vdwg.mxu0
      %v732 = vmax.f32 %v727, 0.0
      %v733 = vmax.f32 %v730, 0.0
      %v734 = vld [vmem:[%s184] sm:$0xff]
      %v735 = vld [vmem:[%s184 + $0x8] sm:$0xff]
      %vm736 = vcmask 130048
      %v738 = vsel %vm736, %v732, 0
      %v741 = vsel %vm736, %v733, 0
      %743 = vmatpush.msra.mxu0 0.0
      %744 = vmatpush.msra.mxu0 0.0
      %745 = vmatpush.msra.mxu0 0.0
      %746 = vmatpush.msra.mxu0 0.0
      %747 = vmatpush.msra.mxu0 0.0
      %748 = vmatpush.msra.mxu0 0.0
      %749 = vmatpush.msra.mxu0 0.0
      %750 = vmatpush.msra.mxu0 0.0
      %751 = vmatpush.msra.mxu0 0.0
      %752 = vmatpush.msra.mxu0 0.0
      %753 = vmatpush.msra.mxu0 0.0
      %754 = vmatpush.msra.mxu0 0.0
      %755 = vmatpush.msra.mxu0 0.0
      %756 = vmatpush.msra.mxu0 0.0
      %757 = vmatpush.msra.mxu0 %v194
      %758 = vmatpush.msra.mxu0 %v193
      %759 = vmatmul.f32.gmra.mxu0 %v738
      %v760 = vpop.f32.mrf.mxu0
      %v761 = vadd.f32 0.0, %v760
      %762 = vmatmul.f32.gmra.mxu0 %v741
      %v763 = vpop.f32.mrf.mxu0
      %v764 = vadd.f32 0.0, %v763
      %765 = vdwg.mxu0
      %v766 = vperm.slane %v195, 0
      %v768 = vsel %vm736, %v734, 0
      %v771 = vsel %vm736, %v735, 0
      %773 = vmatpush.msra.mxu0 0.0
      %774 = vmatpush.msra.mxu0 0.0
      %775 = vmatpush.msra.mxu0 0.0
      %776 = vmatpush.msra.mxu0 0.0
      %777 = vmatpush.msra.mxu0 0.0
      %778 = vmatpush.msra.mxu0 0.0
      %779 = vmatpush.msra.mxu0 0.0
      %780 = vmatpush.msra.mxu0 0.0
      %781 = vmatpush.msra.mxu0 0.0
      %782 = vmatpush.msra.mxu0 0.0
      %783 = vmatpush.msra.mxu0 0.0
      %784 = vmatpush.msra.mxu0 0.0
      %785 = vmatpush.msra.mxu0 0.0
      %786 = vmatpush.msra.mxu0 0.0
      %787 = vmatpush.msra.mxu0 %v764
      %788 = vmatpush.msra.mxu0 %v761
      %789 = vmatmul.f32.gmra.mxu0 %v768
      %v790 = vpop.f32.mrf.mxu0
      %v791 = vadd.f32 %v766, %v790
      %792 = vmatmul.f32.gmra.mxu0 %v771
      %v793 = vpop.f32.mrf.mxu0
      %v794 = vadd.f32 %v766, %v793
      %795 = vdwg.mxu0
      %v796 = vmax.f32 %v791, 0.0
      %v797 = vmax.f32 %v794, 0.0
      %vm798 = vcmask 261120
      %v800 = vsel %vm798, %v796, 0
      %v803 = vsel %vm798, %v797, 0
      %805 = vmatpush.msra.mxu0 0.0
      %806 = vmatpush.msra.mxu0 0.0
      %807 = vmatpush.msra.mxu0 0.0
      %808 = vmatpush.msra.mxu0 0.0
      %809 = vmatpush.msra.mxu0 0.0
      %810 = vmatpush.msra.mxu0 0.0
      %811 = vmatpush.msra.mxu0 0.0
      %812 = vmatpush.msra.mxu0 0.0
      %813 = vmatpush.msra.mxu0 0.0
      %814 = vmatpush.msra.mxu0 0.0
      %815 = vmatpush.msra.mxu0 0.0
      %816 = vmatpush.msra.mxu0 0.0
      %817 = vmatpush.msra.mxu0 %v199
      %818 = vmatpush.msra.mxu0 %v198
      %819 = vmatpush.msra.mxu0 %v197
      %820 = vmatpush.msra.mxu0 %v196
      %821 = vmatmul.f32.gmra.mxu0 %v800
      %v822 = vpop.f32.mrf.mxu0
      %v823 = vadd.f32 0.0, %v822
      %824 = vmatmul.f32.gmra.mxu0 %v803
      %v825 = vpop.f32.mrf.mxu0
      %v826 = vadd.f32 0.0, %v825
      %827 = vdwg.mxu0
      %v828 = vperm.slane %v200, 0
      %829 = vmatpush.msra.mxu0 0.0
      %830 = vmatpush.msra.mxu0 0.0
      %831 = vmatpush.msra.mxu0 0.0
      %832 = vmatpush.msra.mxu0 0.0
      %833 = vmatpush.msra.mxu0 0.0
      %834 = vmatpush.msra.mxu0 0.0
      %835 = vmatpush.msra.mxu0 0.0
      %836 = vmatpush.msra.mxu0 0.0
      %837 = vmatpush.msra.mxu0 0.0
      %838 = vmatpush.msra.mxu0 0.0
      %839 = vmatpush.msra.mxu0 0.0
      %840 = vmatpush.msra.mxu0 0.0
      %841 = vmatpush.msra.mxu0 0.0
      %842 = vmatpush.msra.mxu0 0.0
      %843 = vmatpush.msra.mxu0 %v826
      %844 = vmatpush.msra.mxu0 %v823
      %845 = vmatmul.f32.gmra.mxu0 %v768
      %v846 = vpop.f32.mrf.mxu0
      %v847 = vadd.f32 %v828, %v846
      %848 = vmatmul.f32.gmra.mxu0 %v771
      %v849 = vpop.f32.mrf.mxu0
      %v850 = vadd.f32 %v828, %v849
      %851 = vdwg.mxu0
      %v852 = vmax.f32 %v847, 0.0
      %v853 = vmax.f32 %v850, 0.0
      %v854 = vperm.slane %v205, 0
      %v856 = vsel %vm798, %v852, 0
      %v859 = vsel %vm798, %v853, 0
      %861 = vmatpush.msra.mxu0 0.0
      %862 = vmatpush.msra.mxu0 0.0
      %863 = vmatpush.msra.mxu0 0.0
      %864 = vmatpush.msra.mxu0 0.0
      %865 = vmatpush.msra.mxu0 0.0
      %866 = vmatpush.msra.mxu0 0.0
      %867 = vmatpush.msra.mxu0 0.0
      %868 = vmatpush.msra.mxu0 0.0
      %869 = vmatpush.msra.mxu0 0.0
      %870 = vmatpush.msra.mxu0 0.0
      %871 = vmatpush.msra.mxu0 0.0
      %872 = vmatpush.msra.mxu0 0.0
      %873 = vmatpush.msra.mxu0 %v204
      %874 = vmatpush.msra.mxu0 %v203
      %875 = vmatpush.msra.mxu0 %v202
      %876 = vmatpush.msra.mxu0 %v201
      %877 = vmatmul.f32.gmra.mxu0 %v856
      %v878 = vpop.f32.mrf.mxu0
      %v879 = vadd.f32 %v854, %v878
      %880 = vmatmul.f32.gmra.mxu0 %v859
      %v881 = vpop.f32.mrf.mxu0
      %v882 = vadd.f32 %v854, %v881
      %883 = vdwg.mxu0
      %v884 = vmax.f32 %v879, 0.0
      %v885 = vmax.f32 %v882, 0.0
      %v886 = vsel %vm798, %v884, 0.0
      %v887 = vsel %vm798, %v885, 0.0
      %v888 = vadd.f32 %v886, %v887
      %v889 = vrot.slane %v888, 4
      %v890 = vadd.f32 %v888, %v889
      %v891 = vrot.slane %v890, 2
      %v892 = vadd.f32 %v890, %v891
      %v893 = vrot.slane %v892, 1
      %v894 = vadd.f32 %v892, %v893
      %v896 = vsel %vm798, %v894, 0
      %898 = vmatpush.msra.mxu0 0.0
      %899 = vmatpush.msra.mxu0 0.0
      %900 = vmatpush.msra.mxu0 0.0
      %901 = vmatpush.msra.mxu0 0.0
      %902 = vmatpush.msra.mxu0 0.0
      %903 = vmatpush.msra.mxu0 0.0
      %904 = vmatpush.msra.mxu0 0.0
      %905 = vmatpush.msra.mxu0 0.0
      %906 = vmatpush.msra.mxu0 0.0
      %907 = vmatpush.msra.mxu0 0.0
      %908 = vmatpush.msra.mxu0 0.0
      %909 = vmatpush.msra.mxu0 0.0
      %910 = vmatpush.msra.mxu0 %v209
      %911 = vmatpush.msra.mxu0 %v208
      %912 = vmatpush.msra.mxu0 %v207
      %913 = vmatpush.msra.mxu0 %v206
      %914 = vmatmul.f32.gmra.mxu0 %v896
      %v915 = vpop.f32.mrf.mxu0
      %v916 = vadd.f32 %v210, %v915
      %917 = vdwg.mxu0
      %v918 = vmax.f32 %v916, 0.0
      %v919 = vperm.slane %v918, 0
      %920 = vst [vmem:[%s188] sm:$0xff] %v919
      %p921 = scmp.lt.s32.totalorder %s14, 3
      %s922 = scalar_select %p921, %s14, 3
      %s923 = smul.addr %s922, 8
      %s924 = scalar_lea.vmem %s3, %s923
      // Predicated region
      $region33: #{mesh_network_urur_forward.1} parent=31 // pred_check
        %p925 = pneg %p105
      $region34: #{mesh_network_urur_forward.1} parent=31 // pred_check_branch
        %927 = sbr.rel (%p925) target = $region36
      $region35: #{mesh_network_urur_forward.1} parent=31 // pred_region
        _
      $region36: #{mesh_network_urur_forward.1} parent=31 // pred_fallthru
        _
    $region32: #{mesh_network_urur_forward.1} parent=5 // pred_fallthru
      _
    %p928 = scmp.le.s32.totalorder 2, %s9
    // Predicated region
    $region37: #{mesh_network_urur_forward.1} parent=5 // pred_check
      %p929 = pneg %p928
    $region38: #{mesh_network_urur_forward.1} parent=5 // pred_check_branch
      %931 = sbr.rel (%p929) target = $region40
    $region39: #{mesh_network_urur_forward.1} parent=5 // pred_region
      %s932 = ssub.s32 %s9, 2
      // Predicated region
      $region41: #{mesh_network_urur_forward.1} parent=39 // pred_check
        %p933 = pneg %p111
      $region42: #{mesh_network_urur_forward.1} parent=39 // pred_check_branch
        %935 = sbr.rel (%p933) target = $region44
      $region43: #{mesh_network_urur_forward.1} parent=39 // pred_region
        %p936 = scmp.lt.s32.totalorder %s15, 3
        %s937 = scalar_select %p936, %s15, 3
        %s938 = smul.addr %s937, 8
        %s939 = scalar_lea.vmem %s3, %s938
      $region44: #{mesh_network_urur_forward.1} parent=39 // pred_fallthru
        _
    $region40: #{mesh_network_urur_forward.1} parent=5 // pred_fallthru
      _
  $region6: #{mesh_network_urur_forward.1} parent=0 // loop_footer
    %s13 = sadd.s32 1, %s9
  $region7: #{mesh_network_urur_forward.1} parent=0 // loop_footer_branch
    %8 = sbr.rel target = $region3
  $region8: #{mesh_network_urur_forward.1} parent=0 // loop_exit
    _

</llo_original>
